<compile_context>
chip_gen: v6e
topology: v6e:2x2x1
jax: 0.10.0
libtpu: 0.0.40
codegen_flags: <defaults>
</compile_context>

<pallas_src>
import functools

import jax
import jax.numpy as jnp
from jax.experimental import pallas as pl
from jax.experimental.pallas import tpu as pltpu


def _pool_mlp_kernel(x_ref, w1_ref, b1_ref, w2_ref, b2_ref, s_ref, acc_ref,
                     *, hw, hw_tile, mask_tail):
    """Pass 1: tiled global average pool + tiny MLP -> per-batch scale (1,1,C)."""
    t = pl.program_id(1)
    nt = pl.num_programs(1)

    @pl.when(t == 0)
    def _():
        acc_ref[...] = jnp.zeros_like(acc_ref)

    x = x_ref[...]  # (1, C, hw_tile)
    if mask_tail:
        # Zero out lanes past the true spatial extent on the tail tile
        # (padding lanes may contain garbage; select-with-0 neutralizes it).
        lane = jax.lax.broadcasted_iota(jnp.int32, x.shape, dimension=2)
        x = jnp.where(t * hw_tile + lane < hw, x, 0.0)
    acc_ref[...] += jnp.sum(x, axis=-1)  # (1, C) partial sums

    @pl.when(t == nt - 1)
    def _():
        # Single multiply by the compile-time constant 1/HW (deferred from loop).
        y = acc_ref[...] * (1.0 / hw)                                     # (1, C)
        h = jnp.dot(y, w1_ref[...], preferred_element_type=jnp.float32) + b1_ref[...]
        h = jnp.maximum(h, 0.0)                                           # (1, C//2)
        s = jnp.dot(h, w2_ref[...], preferred_element_type=jnp.float32) + b2_ref[...]
        s = jax.nn.sigmoid(s)                                             # (1, C)
        s_ref[...] = s[:, None, :]                                        # (1, 1, C)


def _scale_kernel(s_ref, x_ref, o_ref):
    """Pass 2: o = x * s, streamed over lane-dense HW tiles."""
    o_ref[...] = x_ref[...] * s_ref[...]  # (1,C,hw_tile) * (1,C,1)


def _pick_hw_tile(hw, c, itemsize, budget_bytes=4 * 1024 * 1024):
    """Largest HW tile whose (1, C, tile) block fits the budget.

    Returns the full extent if it fits (any size is legal when it equals the
    array dim); otherwise a multiple-of-128 tile (tail handled by masking).
    """
    max_lanes = max(128, (budget_bytes // (c * itemsize)) // 128 * 128)
    if hw <= max_lanes:
        return hw
    return max_lanes


def squeeze_excite(x, w1, b1, w2, b2):
    """x: (B, C, H, W) float32. Returns (B, C, H, W) float32."""
    B, C, H, W = x.shape
    Ch = w1.shape[1]  # hidden width = C // 2
    HW = H * W

    x_flat = x.reshape(B, C, HW).astype(jnp.float32)
    b1_2d = b1.reshape(1, -1).astype(jnp.float32)
    b2_2d = b2.reshape(1, -1).astype(jnp.float32)
    w1 = w1.astype(jnp.float32)
    w2 = w2.astype(jnp.float32)

    hw_tile = _pick_hw_tile(HW, C, 4)
    num_t = pl.cdiv(HW, hw_tile)
    mask_tail = (HW % hw_tile) != 0

    # ---- Pass 1: pooled mean + MLP -> scale vector, shape (B, 1, C) ----------
    pool_cost = pl.CostEstimate(
        flops=int(B * C * HW + B * (2 * C * Ch + 2 * Ch * C)),
        transcendentals=int(B * C),
        bytes_accessed=int(B * C * HW * 4 + (2 * C * Ch + Ch + C + B * C) * 4),
    )
    s_b1c = pl.pallas_call(
        functools.partial(_pool_mlp_kernel, hw=HW, hw_tile=hw_tile,
                          mask_tail=mask_tail),
        out_shape=jax.ShapeDtypeStruct((B, 1, C), jnp.float32),
        grid=(B, num_t),
        in_specs=[
            pl.BlockSpec((1, C, hw_tile), lambda b, t: (b, 0, t)),  # x tiles
            pl.BlockSpec((C, Ch), lambda b, t: (0, 0)),             # w1 (resident)
            pl.BlockSpec((1, Ch), lambda b, t: (0, 0)),             # b1 (resident)
            pl.BlockSpec((Ch, C), lambda b, t: (0, 0)),             # w2 (resident)
            pl.BlockSpec((1, C), lambda b, t: (0, 0)),              # b2 (resident)
        ],
        out_specs=pl.BlockSpec((1, 1, C), lambda b, t: (b, 0, 0)),
        scratch_shapes=[pltpu.VMEM((1, C), jnp.float32)],
        compiler_params=pltpu.CompilerParams(
            dimension_semantics=("parallel", "arbitrary"),
            vmem_limit_bytes=32 * 1024 * 1024,
        ),
        cost_estimate=pool_cost,
    )(x_flat, w1, b1_2d, w2, b2_2d)

    # Tiny (B*C elements) layout change so the scale sits on sublanes for pass 2.
    s_col = jnp.transpose(s_b1c, (0, 2, 1))  # (B, C, 1)

    # ---- Pass 2: elementwise scale, streamed over lane-dense HW tiles --------
    scale_cost = pl.CostEstimate(
        flops=int(B * C * HW),
        transcendentals=0,
        bytes_accessed=int(2 * B * C * HW * 4 + B * C * 4),
    )
    out = pl.pallas_call(
        _scale_kernel,
        out_shape=jax.ShapeDtypeStruct((B, C, HW), jnp.float32),
        grid=(B, num_t),
        in_specs=[
            pl.BlockSpec((1, C, 1), lambda b, t: (b, 0, 0)),        # scale (revisited)
            pl.BlockSpec((1, C, hw_tile), lambda b, t: (b, 0, t)),  # x tiles
        ],
        out_specs=pl.BlockSpec((1, C, hw_tile), lambda b, t: (b, 0, t)),
        compiler_params=pltpu.CompilerParams(
            dimension_semantics=("parallel", "parallel"),
            vmem_limit_bytes=32 * 1024 * 1024,
        ),
        cost_estimate=scale_cost,
    )(s_col, x_flat)

    return out.reshape(B, C, H, W)


def reference(x, w1, b1, w2, b2):
    """Pure-JAX reference mirroring the PyTorch module."""
    y = jnp.mean(x, axis=(2, 3))                     # (B, C)
    h = jnp.maximum(y @ w1 + b1, 0.0)                # (B, C//2)
    s = jax.nn.sigmoid(h @ w2 + b2)                  # (B, C)
    return x * s[:, :, None, None]


if __name__ == "__main__":
    B, C, H, W = 2, 4, 16, 16  # C must be even (fc hidden = C // 2)
    key = jax.random.PRNGKey(0)
    kx, k1, k2, k3, k4 = jax.random.split(key, 5)

    x = jax.random.normal(kx, (B, C, H, W), dtype=jnp.float32)
    # torch Linear weights are (out, in); stored here already transposed to (in, out).
    w1 = 0.1 * jax.random.normal(k1, (C, C // 2), dtype=jnp.float32)
    b1 = 0.1 * jax.random.normal(k2, (C // 2,), dtype=jnp.float32)
    w2 = 0.1 * jax.random.normal(k3, (C // 2, C), dtype=jnp.float32)
    b2 = 0.1 * jax.random.normal(k4, (C,), dtype=jnp.float32)

    out = squeeze_excite(x, w1, b1, w2, b2)
    out = jax.block_until_ready(out)

    ref = reference(x, w1, b1, w2, b2)
    assert out.shape == (B, C, H, W)
    assert jnp.allclose(out, ref, atol=1e-5, rtol=1e-5), "mismatch vs reference"

    print("KERNEL_OK")
</pallas_src>

<mosaic_0001>
module attributes {stable_mosaic.version = 11 : i64} {
  func.func @_pool_mlp_kernel(%arg0: i32, %arg1: i32, %arg2: memref<1x4x256xf32, #tpu.memory_space<vmem>>, %arg3: memref<4x2xf32, #tpu.memory_space<vmem>>, %arg4: memref<1x2xf32, #tpu.memory_space<vmem>>, %arg5: memref<2x4xf32, #tpu.memory_space<vmem>>, %arg6: memref<1x4xf32, #tpu.memory_space<vmem>>, %arg7: memref<1x1x4xf32, #tpu.memory_space<vmem>>, %arg8: memref<1x4xf32, #tpu.memory_space<vmem>>) attributes {dimension_semantics = [#tpu.dimension_semantics<parallel>, #tpu.dimension_semantics<arbitrary>], iteration_bounds = array<i64: 2, 1>, scalar_prefetch = 0 : i64, scratch_operands = 1 : i64, tpu.core_type = #tpu.core_type<tc>, window_params = [{transform_indices = @transform_0, window_bounds = array<i64: 1, 4, 256>}, {pipeline_mode = #tpu.pipeline_mode<synchronous>, transform_indices = @transform_1, window_bounds = array<i64: 4, 2>}, {pipeline_mode = #tpu.pipeline_mode<synchronous>, transform_indices = @transform_2, window_bounds = array<i64: 1, 2>}, {pipeline_mode = #tpu.pipeline_mode<synchronous>, transform_indices = @transform_3, window_bounds = array<i64: 2, 4>}, {pipeline_mode = #tpu.pipeline_mode<synchronous>, transform_indices = @transform_4, window_bounds = array<i64: 1, 4>}, {transform_indices = @transform_5, window_bounds = array<i64: 1, 1, 4>}]} {
    %c0_i32 = arith.constant 0 : i32
    %0 = arith.cmpi eq, %arg1, %c0_i32 : i32
    %1 = arith.extui %0 : i1 to i32
    %c0_i32_0 = arith.constant 0 : i32
    %2 = arith.cmpi ne, %1, %c0_i32_0 : i32
    scf.if %2 {
      %cst_9 = arith.constant 0.000000e+00 : f32
      %11 = vector.broadcast %cst_9 : f32 to vector<1x4xf32>
      %c0_10 = arith.constant 0 : index
      %c0_11 = arith.constant 0 : index
      %12 = vector.load %arg8[%c0_10, %c0_11] : memref<1x4xf32, #tpu.memory_space<vmem>>, vector<1x4xf32>
      tpu.vector_store %arg8[%c0_10, %c0_11], %11 {strides = array<i32>} : memref<1x4xf32, #tpu.memory_space<vmem>>, vector<1x4xf32>,
    } else {
    }
    %c0 = arith.constant 0 : index
    %c0_1 = arith.constant 0 : index
    %c0_2 = arith.constant 0 : index
    %3 = vector.load %arg2[%c0, %c0_1, %c0_2] : memref<1x4x256xf32, #tpu.memory_space<vmem>>, vector<1x4x256xf32>
    %c0_3 = arith.constant 0 : index
    %c0_4 = arith.constant 0 : index
    %4 = vector.load %arg8[%c0_3, %c0_4] : memref<1x4xf32, #tpu.memory_space<vmem>>, vector<1x4xf32>
    %cst = arith.constant dense<0.000000e+00> : vector<1x4xf32>
    %5 = vector.multi_reduction <add>, %3, %cst [2] : vector<1x4x256xf32> to vector<1x4xf32>
    %6 = arith.addf %4, %5 : vector<1x4xf32>
    %c0_5 = arith.constant 0 : index
    %c0_6 = arith.constant 0 : index
    %7 = vector.load %arg8[%c0_5, %c0_6] : memref<1x4xf32, #tpu.memory_space<vmem>>, vector<1x4xf32>
    tpu.vector_store %arg8[%c0_5, %c0_6], %6 {strides = array<i32>} : memref<1x4xf32, #tpu.memory_space<vmem>>, vector<1x4xf32>,
    %c0_i32_7 = arith.constant 0 : i32
    %8 = arith.cmpi eq, %arg1, %c0_i32_7 : i32
    %9 = arith.extui %8 : i1 to i32
    %c0_i32_8 = arith.constant 0 : i32
    %10 = arith.cmpi ne, %9, %c0_i32_8 : i32
    scf.if %10 {
      %c0_9 = arith.constant 0 : index
      %c0_10 = arith.constant 0 : index
      %11 = vector.load %arg8[%c0_9, %c0_10] : memref<1x4xf32, #tpu.memory_space<vmem>>, vector<1x4xf32>
      %cst_11 = arith.constant 3.906250e-03 : f32
      %12 = vector.broadcast %cst_11 : f32 to vector<1x4xf32>
      %13 = arith.mulf %11, %12 : vector<1x4xf32>
      %c0_12 = arith.constant 0 : index
      %c0_13 = arith.constant 0 : index
      %14 = vector.load %arg3[%c0_12, %c0_13] : memref<4x2xf32, #tpu.memory_space<vmem>>, vector<4x2xf32>
      %cst_14 = arith.constant dense<0.000000e+00> : vector<1x2xf32>
      %15 = tpu.matmul %13, %14, %cst_14 {dimension_numbers = #tpu.dot_dimension_numbers<[1], [0], [0], [1], [0, 0, 1, 1], [], []>} : vector<1x4xf32>, vector<4x2xf32>, vector<1x2xf32> -> vector<1x2xf32>
      %c0_15 = arith.constant 0 : index
      %c0_16 = arith.constant 0 : index
      %16 = vector.load %arg4[%c0_15, %c0_16] : memref<1x2xf32, #tpu.memory_space<vmem>>, vector<1x2xf32>
      %17 = arith.addf %15, %16 : vector<1x2xf32>
      %cst_17 = arith.constant 0.000000e+00 : f32
      %18 = vector.broadcast %cst_17 : f32 to vector<1x2xf32>
      %19 = arith.maximumf %17, %18 : vector<1x2xf32>
      %c0_18 = arith.constant 0 : index
      %c0_19 = arith.constant 0 : index
      %20 = vector.load %arg5[%c0_18, %c0_19] : memref<2x4xf32, #tpu.memory_space<vmem>>, vector<2x4xf32>
      %cst_20 = arith.constant dense<0.000000e+00> : vector<1x4xf32>
      %21 = tpu.matmul %19, %20, %cst_20 {dimension_numbers = #tpu.dot_dimension_numbers<[1], [0], [0], [1], [0, 0, 1, 1], [], []>} : vector<1x2xf32>, vector<2x4xf32>, vector<1x4xf32> -> vector<1x4xf32>
      %c0_21 = arith.constant 0 : index
      %c0_22 = arith.constant 0 : index
      %22 = vector.load %arg6[%c0_21, %c0_22] : memref<1x4xf32, #tpu.memory_space<vmem>>, vector<1x4xf32>
      %23 = arith.addf %21, %22 : vector<1x4xf32>
      %24 = arith.negf %23 : vector<1x4xf32>
      %25 = math.exp %24 : vector<1x4xf32>
      %cst_23 = arith.constant 1.000000e+00 : f32
      %26 = vector.broadcast %cst_23 : f32 to vector<1x4xf32>
      %27 = arith.addf %26, %25 : vector<1x4xf32>
      %28 = arith.divf %26, %27 : vector<1x4xf32>
      %29 = vector.shape_cast %28 : vector<1x4xf32> to vector<1x1x4xf32>
      %c0_24 = arith.constant 0 : index
      %c0_25 = arith.constant 0 : index
      %c0_26 = arith.constant 0 : index
      %30 = vector.load %arg7[%c0_24, %c0_25, %c0_26] : memref<1x1x4xf32, #tpu.memory_space<vmem>>, vector<1x1x4xf32>
      tpu.vector_store %arg7[%c0_24, %c0_25, %c0_26], %29 {strides = array<i32>} : memref<1x1x4xf32, #tpu.memory_space<vmem>>, vector<1x1x4xf32>,
    } else {
    }
    return
  }
  func.func @transform_0(%arg0: i32, %arg1: i32) -> (i32, i32, i32) {
    %c0_i32 = arith.constant 0 : i32
    %c0_i32_0 = arith.constant 0 : i32
    return %arg0, %c0_i32, %arg1 : i32, i32, i32
  }
  func.func @transform_1(%arg0: i32, %arg1: i32) -> (i32, i32) {
    %c0_i32 = arith.constant 0 : i32
    %c0_i32_0 = arith.constant 0 : i32
    %c0_i32_1 = arith.constant 0 : i32
    return %c0_i32, %c0_i32_0 : i32, i32
  }
  func.func @transform_2(%arg0: i32, %arg1: i32) -> (i32, i32) {
    %c0_i32 = arith.constant 0 : i32
    %c0_i32_0 = arith.constant 0 : i32
    %c0_i32_1 = arith.constant 0 : i32
    return %c0_i32, %c0_i32_0 : i32, i32
  }
  func.func @transform_3(%arg0: i32, %arg1: i32) -> (i32, i32) {
    %c0_i32 = arith.constant 0 : i32
    %c0_i32_0 = arith.constant 0 : i32
    %c0_i32_1 = arith.constant 0 : i32
    return %c0_i32, %c0_i32_0 : i32, i32
  }
  func.func @transform_4(%arg0: i32, %arg1: i32) -> (i32, i32) {
    %c0_i32 = arith.constant 0 : i32
    %c0_i32_0 = arith.constant 0 : i32
    %c0_i32_1 = arith.constant 0 : i32
    return %c0_i32, %c0_i32_0 : i32, i32
  }
  func.func @transform_5(%arg0: i32, %arg1: i32) -> (i32, i32, i32) {
    %c0_i32 = arith.constant 0 : i32
    %c0_i32_0 = arith.constant 0 : i32
    %c0_i32_1 = arith.constant 0 : i32
    return %arg0, %c0_i32, %c0_i32_0 : i32, i32, i32
  }
}

</mosaic_0001>

<llo_original>
// kernel: tpu_custom_call.1
$region0: #{tpu_custom_call.1}
  #allocation0 [shape = 'u32[]', space=smem, size = 0x4, offset = 0x4, fixed_abs, tag = 'smem constant byte address 0x4 - core index']
  #allocation1 [shape = 'u32[144,128]{1,0:T(1,128)}', space=vmem, size = 0x12000, scoped, tag = 'internal scratch']
  #allocation2 [shape = 'f32[1,4]{1,0:T(1,128)}', space=vmem, size = 0x200, scoped, tag = 'scratch operand']
  %s0 = inlined_call_operand.hbm [shape: f32[2,4,256], index: 0, kind: input, shape index: {}]
  %s1 = inlined_call_operand.vmem [shape: f32[4,2], index: 1, kind: input, shape index: {}]
  %s2 = inlined_call_operand.vmem [shape: f32[1,2], index: 2, kind: input, shape index: {}]
  %s3 = inlined_call_operand.vmem [shape: f32[2,4], index: 3, kind: input, shape index: {}]
  %s4 = inlined_call_operand.vmem [shape: f32[1,4], index: 4, kind: input, shape index: {}]
  %s5 = inlined_call_operand.hbm [shape: f32[2,1,4], index: 5, kind: output, shape index: {}]
  %s6 = sld [smem:[#allocation0]]
  $region65: #{tpu_custom_call.1} parent=0
    _
  %s8 = ssub.s32 1, %s6
  %s9 = scalar_select 0, %s8, %s6
  $region1: #{tpu_custom_call.1} parent=0
    #allocation3 [shape = 'u8[8192]{0}', space=vmem, size = 0x2000, scoped, tag = 'input window, operand 0']
    #allocation4 [shape = 's32[2]{0}', space=sflag, size = 0x8, scoped, tag = 'scoped memory for tpu_custom_call.1']
    #allocation5 [shape = 's32[2]{0}', space=sflag, size = 0x8, scoped, tag = 'scoped memory for tpu_custom_call.1']
    #allocation6 [shape = 'u8[1024]{0}', space=vmem, size = 0x400, scoped, tag = 'output window, operand 0']
    %10 = vsyncpa [#allocation4], 0
    %s11 = scalar_lea.sflag [#allocation4], 1
    %12 = vsyncpa %s11, 0
    %13 = vsyncpa [#allocation5], 0
    %s14 = scalar_lea.sflag [#allocation5], 1
    %15 = vsyncpa %s14, 0
    loop: start=0, step=1, limit=4
    $region2: #{tpu_custom_call.1} parent=1 // loop_pre_header
      _
    $region3: #{tpu_custom_call.1} parent=1 // loop_header
      %s17 = sphi 0, %s21
      %p18 = scmp.ge.s32.totalorder %s17, 4
      %s24 = sphi 0, %s36
      %s25 = sphi 0, %s32
      %s26 = sphi 0, %s24
      %s27 = sphi 0, %s25
      %s28 = sphi 0, %s26
      %s29 = sphi 0, %s27
      %s41 = sphi 0, %s43
      %s44 = sphi 0, %s41
      %s45 = sphi 0, %s44
      %s61 = sphi 0, %s45
      %s65 = sphi 0, %s65
      %s67 = sphi 0, %s65
      %s68 = sphi 0, %s67
      %s82 = sphi 0, %s68
      %s86 = sphi 0, %s86
      %s88 = sphi 0, %s86
      %s89 = sphi 0, %s88
      %s103 = sphi 0, %s89
      %s107 = sphi 0, %s107
      %s109 = sphi 0, %s107
      %s110 = sphi 0, %s109
      %s124 = sphi 0, %s110
      %s128 = sphi 0, %s128
      %s130 = sphi 0, %s128
      %s131 = sphi 0, %s130
      %s145 = sphi 0, %s131
      %s151 = sphi 0, %s153
      %s154 = sphi 0, %s151
      %s155 = sphi 0, %s154
      %s171 = sphi 0, %s155
    $region4: #{tpu_custom_call.1} parent=1 // loop_header_branch
      %20 = sbr.rel (%p18) target = $region8
    $region5: #{tpu_custom_call.1} parent=1 // loop_body
      %s22 = ssub.s32 %s17, 1
      %s23 = ssub.s32 %s17, 2
      %s30 = sadd.s32 1, %s25
      %p31 = scmp.ge.s32.totalorder %s30, 1
      %s32 = scalar_select %p31, 0, %s30
      %s33 = sadd.s32 1, %s24
      %s34 = scalar_select %p31, %s33, %s24
      %p35 = scmp.ge.s32.totalorder %s34, 2
      %s36 = scalar_select %p35, 0, %s34
      %s37 = ssub.s32 %s24, %s36
      %s38 = ssub.s32 %s25, %s32
      %s39 = sor.u32 %s37, %s38
      %p40 = scmp.eq.s32.totalorder %s39, 0
      %s42 = sadd.s32 %s41, 1
      %s43 = scalar_select %p40, %s41, %s42
      %p46 = pneg %p40
      %p47 = scmp.eq.s32.totalorder %s17, 1
      %p48 = por %p46, %p47
      %p49 = scmp.ne.s32.totalorder %s41, %s44
      %p50 = scmp.eq.s32.totalorder %s17, 0
      %p51 = por %p49, %p50
      %p52 = scmp.ne.s32.totalorder %s41, %s44
      %p53 = scmp.eq.s32.totalorder %s22, 1
      %p54 = por %p52, %p53
      %p55 = scmp.ne.s32.totalorder %s44, %s45
      %p56 = scmp.eq.s32.totalorder %s22, 0
      %p57 = por %p55, %p56
      %p58 = scmp.ne.s32.totalorder %s44, %s45
      %p59 = scmp.eq.s32.totalorder %s23, 1
      %p60 = por %p58, %p59
      %p62 = scmp.ne.s32.totalorder %s45, %s61
      %p63 = scmp.eq.s32.totalorder %s23, 0
      %p64 = por %p62, %p63
      %s66 = sadd.s32 %s65, 1
      %p69 = scmp.eq.s32.totalorder %s17, 1
      %p70 = scmp.ne.s32.totalorder %s65, %s67
      %p71 = scmp.eq.s32.totalorder %s17, 0
      %p72 = por %p70, %p71
      %p73 = scmp.ne.s32.totalorder %s65, %s67
      %p74 = scmp.eq.s32.totalorder %s22, 1
      %p75 = por %p73, %p74
      %p76 = scmp.ne.s32.totalorder %s67, %s68
      %p77 = scmp.eq.s32.totalorder %s22, 0
      %p78 = por %p76, %p77
      %p79 = scmp.ne.s32.totalorder %s67, %s68
      %p80 = scmp.eq.s32.totalorder %s23, 1
      %p81 = por %p79, %p80
      %p83 = scmp.ne.s32.totalorder %s68, %s82
      %p84 = scmp.eq.s32.totalorder %s23, 0
      %p85 = por %p83, %p84
      %s87 = sadd.s32 %s86, 1
      %p90 = scmp.eq.s32.totalorder %s17, 1
      %p91 = scmp.ne.s32.totalorder %s86, %s88
      %p92 = scmp.eq.s32.totalorder %s17, 0
      %p93 = por %p91, %p92
      %p94 = scmp.ne.s32.totalorder %s86, %s88
      %p95 = scmp.eq.s32.totalorder %s22, 1
      %p96 = por %p94, %p95
      %p97 = scmp.ne.s32.totalorder %s88, %s89
      %p98 = scmp.eq.s32.totalorder %s22, 0
      %p99 = por %p97, %p98
      %p100 = scmp.ne.s32.totalorder %s88, %s89
      %p101 = scmp.eq.s32.totalorder %s23, 1
      %p102 = por %p100, %p101
      %p104 = scmp.ne.s32.totalorder %s89, %s103
      %p105 = scmp.eq.s32.totalorder %s23, 0
      %p106 = por %p104, %p105
      %s108 = sadd.s32 %s107, 1
      %p111 = scmp.eq.s32.totalorder %s17, 1
      %p112 = scmp.ne.s32.totalorder %s107, %s109
      %p113 = scmp.eq.s32.totalorder %s17, 0
      %p114 = por %p112, %p113
      %p115 = scmp.ne.s32.totalorder %s107, %s109
      %p116 = scmp.eq.s32.totalorder %s22, 1
      %p117 = por %p115, %p116
      %p118 = scmp.ne.s32.totalorder %s109, %s110
      %p119 = scmp.eq.s32.totalorder %s22, 0
      %p120 = por %p118, %p119
      %p121 = scmp.ne.s32.totalorder %s109, %s110
      %p122 = scmp.eq.s32.totalorder %s23, 1
      %p123 = por %p121, %p122
      %p125 = scmp.ne.s32.totalorder %s110, %s124
      %p126 = scmp.eq.s32.totalorder %s23, 0
      %p127 = por %p125, %p126
      %s129 = sadd.s32 %s128, 1
      %p132 = scmp.eq.s32.totalorder %s17, 1
      %p133 = scmp.ne.s32.totalorder %s128, %s130
      %p134 = scmp.eq.s32.totalorder %s17, 0
      %p135 = por %p133, %p134
      %p136 = scmp.ne.s32.totalorder %s128, %s130
      %p137 = scmp.eq.s32.totalorder %s22, 1
      %p138 = por %p136, %p137
      %p139 = scmp.ne.s32.totalorder %s130, %s131
      %p140 = scmp.eq.s32.totalorder %s22, 0
      %p141 = por %p139, %p140
      %p142 = scmp.ne.s32.totalorder %s130, %s131
      %p143 = scmp.eq.s32.totalorder %s23, 1
      %p144 = por %p142, %p143
      %p146 = scmp.ne.s32.totalorder %s131, %s145
      %p147 = scmp.eq.s32.totalorder %s23, 0
      %p148 = por %p146, %p147
      %s149 = ssub.s32 %s24, %s36
      %p150 = scmp.eq.s32.totalorder %s149, 0
      %s152 = sadd.s32 %s151, 1
      %s153 = scalar_select %p150, %s151, %s152
      %p156 = pneg %p150
      %p157 = scmp.eq.s32.totalorder %s17, 1
      %p158 = por %p156, %p157
      %p159 = scmp.ne.s32.totalorder %s151, %s154
      %p160 = scmp.eq.s32.totalorder %s17, 0
      %p161 = por %p159, %p160
      %p162 = scmp.ne.s32.totalorder %s151, %s154
      %p163 = scmp.eq.s32.totalorder %s22, 1
      %p164 = por %p162, %p163
      %p165 = scmp.ne.s32.totalorder %s154, %s155
      %p166 = scmp.eq.s32.totalorder %s22, 0
      %p167 = por %p165, %p166
      %p168 = scmp.ne.s32.totalorder %s154, %s155
      %p169 = scmp.eq.s32.totalorder %s23, 1
      %p170 = por %p168, %p169
      %p172 = scmp.ne.s32.totalorder %s155, %s171
      %p173 = scmp.eq.s32.totalorder %s23, 0
      %p174 = por %p172, %p173
      %p175 = scmp.le.s32.totalorder 1, %s17
      %p176 = scmp.lt.s32.totalorder %s17, 3
      %p177 = pnand %p175, %p176
      %p178 = pneg %p177
      // Predicated region
      $region9: #{tpu_custom_call.1} parent=5 // pred_check
        _
      $region10: #{tpu_custom_call.1} parent=5 // pred_check_branch
        %180 = sbr.rel (%p177) target = $region12
      $region11: #{tpu_custom_call.1} parent=5 // pred_region
        %s181 = ssub.s32 %s17, 1
        // Predicated region
        $region13: #{tpu_custom_call.1} parent=11 // pred_check
          %p182 = pneg %p78
        $region14: #{tpu_custom_call.1} parent=11 // pred_check_branch
          %184 = sbr.rel (%p182) target = $region16
        $region15: #{tpu_custom_call.1} parent=11 // pred_region
          _
        $region16: #{tpu_custom_call.1} parent=11 // pred_fallthru
          _
        // Predicated region
        $region17: #{tpu_custom_call.1} parent=11 // pred_check
          %p185 = pneg %p99
        $region18: #{tpu_custom_call.1} parent=11 // pred_check_branch
          %187 = sbr.rel (%p185) target = $region20
        $region19: #{tpu_custom_call.1} parent=11 // pred_region
          _
        $region20: #{tpu_custom_call.1} parent=11 // pred_fallthru
          _
        // Predicated region
        $region21: #{tpu_custom_call.1} parent=11 // pred_check
          %p188 = pneg %p120
        $region22: #{tpu_custom_call.1} parent=11 // pred_check_branch
          %190 = sbr.rel (%p188) target = $region24
        $region23: #{tpu_custom_call.1} parent=11 // pred_region
          _
        $region24: #{tpu_custom_call.1} parent=11 // pred_fallthru
          _
        // Predicated region
        $region25: #{tpu_custom_call.1} parent=11 // pred_check
          %p191 = pneg %p141
        $region26: #{tpu_custom_call.1} parent=11 // pred_check_branch
          %193 = sbr.rel (%p191) target = $region28
        $region27: #{tpu_custom_call.1} parent=11 // pred_region
          _
        $region28: #{tpu_custom_call.1} parent=11 // pred_fallthru
          _
      $region12: #{tpu_custom_call.1} parent=5 // pred_fallthru
        _
      %p194 = scmp.lt.s32.totalorder %s17, 2
      // Predicated region
      $region29: #{tpu_custom_call.1} parent=5 // pred_check
        %p195 = pneg %p194
      $region30: #{tpu_custom_call.1} parent=5 // pred_check_branch
        %197 = sbr.rel (%p195) target = $region32
      $region31: #{tpu_custom_call.1} parent=5 // pred_region
        // Predicated region
        $region33: #{tpu_custom_call.1} parent=31 // pred_check
          %p198 = pneg %p51
        $region34: #{tpu_custom_call.1} parent=31 // pred_check_branch
          %200 = sbr.rel (%p198) target = $region36
        $region35: #{tpu_custom_call.1} parent=31 // pred_region
          %s201 = sand.u32 %s41, 1
          %s202 = scalar_lea.sflag [#allocation4], %s201
          %s203 = sand.u32 %s41, 1
          %s204 = smul.addr %s203, 8
          %s205 = scalar_lea.vmem [#allocation3], %s204
          %s206 = smul.u32 2, %s25
          %s208 = ssub.s32 128, 128
          %209 = vsyncadd %s202, %s208
          %s210 = smul.addr %s24, 2
          %s211 = sadd.s32 %s206, %s210
          %s212 = smul.addr %s211, 64
          %s213 = scalar_lea.hbm %s0, %s212
          %s215 = sshll.u32 %s205, 4
          %s216 = int_to_ptr.vmem [resolvable:$true] %s215
          %218 = dma.hbm_to_vmem [thread:$0]  %s213, 128, %s216, %s202
        $region36: #{tpu_custom_call.1} parent=31 // pred_fallthru
          _
      $region32: #{tpu_custom_call.1} parent=5 // pred_fallthru
        _
      %p219 = scmp.le.s32.totalorder 1, %s17
      %p220 = scmp.lt.s32.totalorder %s17, 3
      %p221 = pnand %p219, %p220
      %p222 = pneg %p221
      // Predicated region
      $region37: #{tpu_custom_call.1} parent=5 // pred_check
        _
      $region38: #{tpu_custom_call.1} parent=5 // pred_check_branch
        %224 = sbr.rel (%p221) target = $region40
      $region39: #{tpu_custom_call.1} parent=5 // pred_region
        %s225 = ssub.s32 %s17, 1
        %s226 = sand.u32 %s44, 1
        %s227 = scalar_lea.sflag [#allocation4], %s226
        %s228 = sand.u32 %s44, 1
        %s229 = smul.addr %s228, 8
        %s230 = scalar_lea.vmem [#allocation3], %s229
        // Predicated region
        $region41: #{tpu_custom_call.1} parent=39 // pred_check
          %p231 = pneg %p57
        $region42: #{tpu_custom_call.1} parent=39 // pred_check_branch
          %233 = sbr.rel (%p231) target = $region44
        $region43: #{tpu_custom_call.1} parent=39 // pred_region
          %234 = dma.done %s227, 128
        $region44: #{tpu_custom_call.1} parent=39 // pred_fallthru
          _
        %s235 = sand.u32 %s44, 1
        %s236 = scalar_lea.sflag [#allocation4], %s235
        %s237 = sand.u32 %s44, 1
        %s238 = smul.addr %s237, 8
        %s239 = scalar_lea.vmem [#allocation3], %s238
        %p240 = pneg %p57
        %p241 = pneg %p54
        %p242 = pneg %p78
        %p243 = pneg %p75
        %p244 = pneg %p99
        %p245 = pneg %p96
        %p246 = pneg %p120
        %p247 = pneg %p117
        %p248 = pneg %p141
        %p249 = pneg %p138
        %p250 = pneg %p167
        %p251 = pneg %p164
        %s252 = sand.u32 %s154, 1
        %s253 = scalar_lea.sflag [#allocation5], %s252
        %s254 = sand.u32 %s154, 1
        %s255 = scalar_lea.vmem [#allocation6], %s254
        %s256 = smul.u32 2, %s27
        %p257 = scmp.eq.s32.totalorder %s27, 0
        // Predicated region
        $region45: #{tpu_custom_call.1} parent=39 // pred_check
          %p258 = pneg %p257
        $region46: #{tpu_custom_call.1} parent=39 // pred_check_branch
          %260 = sbr.rel (%p258) target = $region48
        $region47: #{tpu_custom_call.1} parent=39 // pred_region
          %vm261 = vcmask 24576
          %262 = vst.msk [vmem:[#allocation2] sm:$0x1] %vm261, 0.0
        $region48: #{tpu_custom_call.1} parent=39 // pred_fallthru
          _
        %v263 = vld [vmem:[%s230] sm:$0xff]
        %v264 = vld [vmem:[#allocation2] sm:$0x1]
        %v266 = vcombine.high %v263, %v263
        %vm268 = vcmask 1043456
        %v269 = vsel %vm268, %v263, 0.0
        %v270 = vsel %vm268, %v266, 0.0
        %v271 = vadd.f32 %v269, %v270
        %272 = vadd.xlane.f32.xlu0 %v271
        %v273 = vpop.xlane.xlu0 %272
        %v275 = vlaneseq
        %v276 = vshrl.u32 %v275, 7
        %v277 = vsub.s32 0, %v276
        %v278 = vrot.slane %v273, %v277
        %v279 = vlaneseq
        %v280 = vshrl.u32 %v279, 7
        %v281 = vsub.s32 1, %v280
        %v282 = vrot.slane %v273, %v281
        %v283 = vlaneseq
        %v284 = vshrl.u32 %v283, 7
        %v285 = vsub.s32 2, %v284
        %v286 = vrot.slane %v273, %v285
        %v287 = vlaneseq
        %v288 = vshrl.u32 %v287, 7
        %v289 = vsub.s32 3, %v288
        %v290 = vrot.slane %v273, %v289
        %v291 = vcombine.low %v278, %v282
        %v292 = vcombine.low %v286, %v290
        %v294 = vunpack.c.l.s4 1966171168
        %v295 = vunpack.c.0.s8 %v294
        %v296 = vlaneseq
        %v297 = vshrl.u32 %v296, 7
        %v298 = vsub.s32 %v295, %v297
        %v299 = vrot.slane %v291, %v298
        %v301 = vunpack.c.l.s4 1966171168
        %v302 = vunpack.c.0.s8 %v301
        %v303 = vlaneseq
        %v304 = vshrl.u32 %v303, 7
        %v305 = vsub.s32 %v302, %v304
        %v306 = vrot.slane %v292, %v305
        %v307 = vcombine.low %v299, %v306
        %v309 = vunpack.c.l.s4 1966171168
        %v310 = vunpack.c.0.s8 %v309
        %v311 = vlaneseq
        %v312 = vshrl.u32 %v311, 7
        %v313 = vsub.s32 %v310, %v312
        %v314 = vrot.slane %v307, %v313
        %315 = vset.pattern.permute.xlu0 0
        %316 = vperm.xlu0 %315, %v314
        %v317 = vpop.permute.xlu0 %316
        %v318 = vlaneseq
        %v319 = vand.u32 %v318, 127
        %v320 = vlaneseq
        %v321 = vshrl.u32 %v320, 7
        %v322 = vsub.s32 %v319, %v321
        %v323 = vrot.slane %v317, %v322
        %v325 = vunpack.c.l.s4 1966171168
        %v326 = vunpack.c.0.s8 %v325
        %v327 = vlaneseq
        %v328 = vshrl.u32 %v327, 7
        %v329 = vsub.s32 %v326, %v328
        %v330 = vrot.slane %v323, %v329
        %v332 = vunpack.c.l.s4 1966171168
        %v333 = vunpack.c.0.s8 %v332
        %v334 = vlaneseq
        %v335 = vshrl.u32 %v334, 7
        %v336 = vsub.s32 %v333, %v335
        %v337 = vrot.slane %v330, %v336
        %v339 = vadd.f32 %v264, %v337
        %vm340 = vcmask 24576
        %341 = vst.msk [vmem:[#allocation2] sm:$0x1] %vm340, %v339
        // Predicated region
        $region49: #{tpu_custom_call.1} parent=39 // pred_check
          %p342 = pneg %p257
        $region50: #{tpu_custom_call.1} parent=39 // pred_check_branch
          %344 = sbr.rel (%p342) target = $region52
        $region51: #{tpu_custom_call.1} parent=39 // pred_region
          %v345 = vld [vmem:[#allocation2] sm:$0x1]
          %v346 = vmul.f32 %v345, 0.00390625
          %v347 = vld [vmem:[%s1] sm:$0xf]
          %v348 = vld [vmem:[%s2] sm:$0x1]
          %vm349 = vcmask 31744
          %v351 = vsel %vm349, %v346, 0
          %v354 = vsel %vm268, %v347, 0
          %356 = vmatprep.subr.mxu0 0.0
          %357 = vmatpush1.msra.mxu0 0.0
          %358 = vmatprep.subr.mxu0 0.0
          %359 = vmatpush1.msra.mxu0 0.0
          %360 = vmatprep.subr.mxu0 0.0
          %361 = vmatpush1.msra.mxu0 0.0
          %362 = vmatprep.subr.mxu0 0.0
          %363 = vmatpush1.msra.mxu0 0.0
          %364 = vmatprep.subr.mxu0 0.0
          %365 = vmatpush1.msra.mxu0 0.0
          %366 = vmatprep.subr.mxu0 0.0
          %367 = vmatpush1.msra.mxu0 0.0
          %368 = vmatprep.subr.mxu0 0.0
          %369 = vmatpush1.msra.mxu0 0.0
          %370 = vmatprep.subr.mxu0 0.0
          %371 = vmatpush1.msra.mxu0 0.0
          %372 = vmatprep.subr.mxu0 0.0
          %373 = vmatpush1.msra.mxu0 0.0
          %374 = vmatprep.subr.mxu0 0.0
          %375 = vmatpush1.msra.mxu0 0.0
          %376 = vmatprep.subr.mxu0 0.0
          %377 = vmatpush1.msra.mxu0 0.0
          %378 = vmatprep.subr.mxu0 0.0
          %379 = vmatpush1.msra.mxu0 0.0
          %380 = vmatprep.subr.mxu0 0.0
          %381 = vmatpush1.msra.mxu0 0.0
          %382 = vmatprep.subr.mxu0 0.0
          %383 = vmatpush1.msra.mxu0 0.0
          %384 = vmatprep.subr.mxu0 0.0
          %385 = vmatpush1.msra.mxu0 0.0
          %386 = vmatprep.subr.mxu0 0.0
          %387 = vmatpush1.msra.mxu0 %v354
          %388 = vmatprep.subr.mxu0 0.0
          %389 = vmatpush2.msra.mxu0 0.0
          %390 = vmatprep.subr.mxu0 0.0
          %391 = vmatpush2.msra.mxu0 0.0
          %392 = vmatprep.subr.mxu0 0.0
          %393 = vmatpush2.msra.mxu0 0.0
          %394 = vmatprep.subr.mxu0 0.0
          %395 = vmatpush2.msra.mxu0 0.0
          %396 = vmatprep.subr.mxu0 0.0
          %397 = vmatpush2.msra.mxu0 0.0
          %398 = vmatprep.subr.mxu0 0.0
          %399 = vmatpush2.msra.mxu0 0.0
          %400 = vmatprep.subr.mxu0 0.0
          %401 = vmatpush2.msra.mxu0 0.0
          %402 = vmatprep.subr.mxu0 0.0
          %403 = vmatpush2.msra.mxu0 0.0
          %404 = vmatprep.subr.mxu0 0.0
          %405 = vmatpush2.msra.mxu0 0.0
          %406 = vmatprep.subr.mxu0 0.0
          %407 = vmatpush2.msra.mxu0 0.0
          %408 = vmatprep.subr.mxu0 0.0
          %409 = vmatpush2.msra.mxu0 0.0
          %410 = vmatprep.subr.mxu0 0.0
          %411 = vmatpush2.msra.mxu0 0.0
          %412 = vmatprep.subr.mxu0 0.0
          %413 = vmatpush2.msra.mxu0 0.0
          %414 = vmatprep.subr.mxu0 0.0
          %415 = vmatpush2.msra.mxu0 0.0
          %416 = vmatprep.subr.mxu0 0.0
          %417 = vmatpush2.msra.mxu0 0.0
          %418 = vmatprep.subr.mxu0 0.0
          %419 = vmatpush2.msra.mxu0 0.0
          %420 = vmatprep.mubr.f32.mxu0 0.0
          %421 = vmatmul.mubr.f32.gmra.mxu0 %v351
          %v422 = vpop.f32.mrf.mxu0
          %v423 = vadd.f32 %v348, %v422
          %v424 = vpop.f32.mrf.mxu0
          %425 = vdwg.mxu0
          %v426 = vmax.f32 %v423, 0.0
          %v427 = vld [vmem:[%s3] sm:$0x3]
          %v428 = vld [vmem:[%s4] sm:$0x1]
          %vm429 = vcmask 15360
          %v431 = vsel %vm429, %v426, 0
          %vm433 = vcmask 1041408
          %v435 = vsel %vm433, %v427, 0
          %437 = vmatprep.subr.mxu0 0.0
          %438 = vmatpush1.msra.mxu0 0.0
          %439 = vmatprep.subr.mxu0 0.0
          %440 = vmatpush1.msra.mxu0 0.0
          %441 = vmatprep.subr.mxu0 0.0
          %442 = vmatpush1.msra.mxu0 0.0
          %443 = vmatprep.subr.mxu0 0.0
          %444 = vmatpush1.msra.mxu0 0.0
          %445 = vmatprep.subr.mxu0 0.0
          %446 = vmatpush1.msra.mxu0 0.0
          %447 = vmatprep.subr.mxu0 0.0
          %448 = vmatpush1.msra.mxu0 0.0
          %449 = vmatprep.subr.mxu0 0.0
          %450 = vmatpush1.msra.mxu0 0.0
          %451 = vmatprep.subr.mxu0 0.0
          %452 = vmatpush1.msra.mxu0 0.0
          %453 = vmatprep.subr.mxu0 0.0
          %454 = vmatpush1.msra.mxu0 0.0
          %455 = vmatprep.subr.mxu0 0.0
          %456 = vmatpush1.msra.mxu0 0.0
          %457 = vmatprep.subr.mxu0 0.0
          %458 = vmatpush1.msra.mxu0 0.0
          %459 = vmatprep.subr.mxu0 0.0
          %460 = vmatpush1.msra.mxu0 0.0
          %461 = vmatprep.subr.mxu0 0.0
          %462 = vmatpush1.msra.mxu0 0.0
          %463 = vmatprep.subr.mxu0 0.0
          %464 = vmatpush1.msra.mxu0 0.0
          %465 = vmatprep.subr.mxu0 0.0
          %466 = vmatpush1.msra.mxu0 0.0
          %467 = vmatprep.subr.mxu0 0.0
          %468 = vmatpush1.msra.mxu0 %v435
          %469 = vmatprep.subr.mxu0 0.0
          %470 = vmatpush2.msra.mxu0 0.0
          %471 = vmatprep.subr.mxu0 0.0
          %472 = vmatpush2.msra.mxu0 0.0
          %473 = vmatprep.subr.mxu0 0.0
          %474 = vmatpush2.msra.mxu0 0.0
          %475 = vmatprep.subr.mxu0 0.0
          %476 = vmatpush2.msra.mxu0 0.0
          %477 = vmatprep.subr.mxu0 0.0
          %478 = vmatpush2.msra.mxu0 0.0
          %479 = vmatprep.subr.mxu0 0.0
          %480 = vmatpush2.msra.mxu0 0.0
          %481 = vmatprep.subr.mxu0 0.0
          %482 = vmatpush2.msra.mxu0 0.0
          %483 = vmatprep.subr.mxu0 0.0
          %484 = vmatpush2.msra.mxu0 0.0
          %485 = vmatprep.subr.mxu0 0.0
          %486 = vmatpush2.msra.mxu0 0.0
          %487 = vmatprep.subr.mxu0 0.0
          %488 = vmatpush2.msra.mxu0 0.0
          %489 = vmatprep.subr.mxu0 0.0
          %490 = vmatpush2.msra.mxu0 0.0
          %491 = vmatprep.subr.mxu0 0.0
          %492 = vmatpush2.msra.mxu0 0.0
          %493 = vmatprep.subr.mxu0 0.0
          %494 = vmatpush2.msra.mxu0 0.0
          %495 = vmatprep.subr.mxu0 0.0
          %496 = vmatpush2.msra.mxu0 0.0
          %497 = vmatprep.subr.mxu0 0.0
          %498 = vmatpush2.msra.mxu0 0.0
          %499 = vmatprep.subr.mxu0 0.0
          %500 = vmatpush2.msra.mxu0 0.0
          %501 = vmatprep.mubr.f32.mxu0 0.0
          %502 = vmatmul.mubr.f32.gmra.mxu0 %v431
          %v503 = vpop.f32.mrf.mxu0
          %v504 = vadd.f32 %v428, %v503
          %v505 = vpop.f32.mrf.mxu0
          %506 = vdwg.mxu0
          %v507 = vxor.u32 %v504, 2147483648
          %v508 = vmul.f32 %v507, 1.442695
          %v509 = vpow.pop %v508
          %v510 = vadd.f32 %v509, 1.0
          %v511 = vrcp.pop %v510
          %v512 = vmul.f32 1.0, %v511
          %513 = vst.msk [vmem:[%s255] sm:$0x1] %vm340, %v512
        $region52: #{tpu_custom_call.1} parent=39 // pred_fallthru
          _
        %s514 = sand.u32 %s154, 1
        %s515 = scalar_lea.sflag [#allocation5], %s514
        %s516 = sand.u32 %s154, 1
        %s517 = scalar_lea.vmem [#allocation6], %s516
        // Predicated region
        $region53: #{tpu_custom_call.1} parent=39 // pred_check
          %p518 = pneg %p164
        $region54: #{tpu_custom_call.1} parent=39 // pred_check_branch
          %520 = sbr.rel (%p518) target = $region56
        $region55: #{tpu_custom_call.1} parent=39 // pred_region
          %s522 = ssub.s32 16, 16
          %523 = vsyncadd %s515, %s522
          %s524 = smul.addr %s26, 16
          %s525 = scalar_lea.hbm %s5, %s524
          %s527 = sshll.u32 %s517, 4
          %s528 = int_to_ptr.vmem [resolvable:$true] %s527
          %530 = dma.vmem_to_hbm [thread:$0]  %s528, 16, %s525, %s515
        $region56: #{tpu_custom_call.1} parent=39 // pred_fallthru
          _
      $region40: #{tpu_custom_call.1} parent=5 // pred_fallthru
        _
      %p531 = scmp.le.s32.totalorder 2, %s17
      // Predicated region
      $region57: #{tpu_custom_call.1} parent=5 // pred_check
        %p532 = pneg %p531
      $region58: #{tpu_custom_call.1} parent=5 // pred_check_branch
        %534 = sbr.rel (%p532) target = $region60
      $region59: #{tpu_custom_call.1} parent=5 // pred_region
        %s535 = ssub.s32 %s17, 2
        // Predicated region
        $region61: #{tpu_custom_call.1} parent=59 // pred_check
          %p536 = pneg %p170
        $region62: #{tpu_custom_call.1} parent=59 // pred_check_branch
          %538 = sbr.rel (%p536) target = $region64
        $region63: #{tpu_custom_call.1} parent=59 // pred_region
          %s539 = sand.u32 %s155, 1
          %s540 = scalar_lea.sflag [#allocation5], %s539
          %s541 = sand.u32 %s155, 1
          %s542 = scalar_lea.vmem [#allocation6], %s541
          %543 = dma.done %s540, 16
        $region64: #{tpu_custom_call.1} parent=59 // pred_fallthru
          _
      $region60: #{tpu_custom_call.1} parent=5 // pred_fallthru
        _
    $region6: #{tpu_custom_call.1} parent=1 // loop_footer
      %s21 = sadd.s32 1, %s17
    $region7: #{tpu_custom_call.1} parent=1 // loop_footer_branch
      %16 = sbr.rel target = $region3
    $region8: #{tpu_custom_call.1} parent=1 // loop_exit
      _
    %544 = vsyncpa [#allocation4], 1
    %s545 = scalar_lea.sflag [#allocation4], 1
    %546 = vsyncpa %s545, 1
    %547 = vsyncpa [#allocation5], 1
    %s548 = scalar_lea.sflag [#allocation5], 1
    %549 = vsyncpa %s548, 1

</llo_original>
